<compile_context>
chip_gen: v7x
topology: tpu7x:2x2x1
jax: 0.10.0
libtpu: 0.0.40
codegen_flags: <defaults>
</compile_context>

<pallas_src>
import numpy as np
import jax
import jax.numpy as jnp
from jax.experimental import pallas as pl
from jax.experimental.pallas import tpu as pltpu


MATMUL_DTYPE = jnp.bfloat16          # MXU-native on v5e/v6e/v7x; f32 accumulate.
VMEM_SPEC = pl.BlockSpec(memory_space=pltpu.MemorySpace.VMEM)


# ----------------------------------------------------------------------------
# Fused forward kernel: five lane-dense MXU matmuls, everything in VMEM.
# ----------------------------------------------------------------------------
def _fused_forward_kernel(sino_ref, c1_ref, b1_ref, c2_ref, b2_ref,
                          c3_ref, b3_ref, m_ref,
                          sino_pred_ref, img_sino_ref, img_pred_ref,
                          lhs_ref, cat_ref):
    # sino_ref : (B, A*D)        f32  lane-dense sinogram
    # c1_ref   : (A*D, C*A*D)    bf16   b1_ref: (1, C*A*D) f32
    # c2_ref   : (C*A*D, A*D)    bf16   b2_ref: (1, A*D)   f32
    # c3_ref   : (2*H*W, H*W)    bf16   b3_ref: (1, H*W)   f32
    # m_ref    : (A*D, H*W)      bf16   backprojection system matrix
    # outputs  : sino_pred (B, A*D), img_sino (B, H*W), img_pred (B, H*W)  f32
    # scratch  : lhs_ref (2B, A*D) f32, cat_ref (B, 2*H*W) f32
    B, AD = sino_ref.shape
    HW = m_ref.shape[1]

    x = sino_ref[...]                                                  # (B, AD)

    # sino_model: Conv2d(1,C,5,p=2) -> Conv2d(C,1,5,p=2), as two MXU matmuls
    # against precomputed dense conv operators (zero padding encoded inside).
    h1 = jnp.dot(x.astype(MATMUL_DTYPE), c1_ref[...],
                 preferred_element_type=jnp.float32) + b1_ref[...]     # (B, C*AD)
    sino_pred = jnp.dot(h1.astype(MATMUL_DTYPE), c2_ref[...],
                        preferred_element_type=jnp.float32) + b2_ref[...]
    sino_pred_ref[...] = sino_pred                                     # (B, AD)

    # Both backprojections stacked into ONE (2B, AD) @ (AD, HW) MXU matmul:
    # rows [0, B) = bp(sino), rows [B, 2B) = bp(sino_pred).
    lhs_ref[0:B, :] = x
    lhs_ref[B:2 * B, :] = sino_pred
    imgs = jnp.dot(lhs_ref[...].astype(MATMUL_DTYPE), m_ref[...],
                   preferred_element_type=jnp.float32)                 # (2B, HW)
    img_sino = imgs[B:]
    img_sino_ref[...] = img_sino

    # img_model: Conv2d(2,1,3,p=1) on the channel concat [img, img_sino].
    # Channel-major flatten (columns [0,HW)=ch0, [HW,2HW)=ch1) matches the
    # rows of the c3 operator; the concat happens in VMEM scratch, in-kernel.
    cat_ref[:, 0:HW] = imgs[:B]
    cat_ref[:, HW:2 * HW] = img_sino
    img_pred = jnp.dot(cat_ref[...].astype(MATMUL_DTYPE), c3_ref[...],
                       preferred_element_type=jnp.float32) + b3_ref[...]
    img_pred_ref[...] = img_pred                                       # (B, HW)


# ----------------------------------------------------------------------------
# Host-side precompute (numpy, done once at init and cached per geometry).
# ----------------------------------------------------------------------------
def conv2d_as_matrix(w, b, H, W, padding):
    """Dense operator C (Cin*H*W, Cout*H*W) and bias row (1, Cout*H*W) such
    that  conv2d(x).reshape(B, Cout*H*W) == x.reshape(B, Cin*H*W) @ C + bias
    for a stride-1, zero-padded NCHW Conv2d (channel-major flatten)."""
    w = np.asarray(w, np.float32)
    b = np.asarray(b, np.float32)
    Cout, Cin, K, _ = w.shape
    C = np.zeros((Cin * H * W, Cout * H * W), np.float32)
    oh = np.arange(H)[:, None]
    ow = np.arange(W)[None, :]
    for co in range(Cout):
        for ci in range(Cin):
            for kh in range(K):
                for kw in range(K):
                    ih = oh + kh - padding
                    iw = ow + kw - padding
                    valid = (ih >= 0) & (ih < H) & (iw >= 0) & (iw < W)
                    rows = (ci * H * W + ih * W + iw)[valid]
                    cols = np.broadcast_to(co * H * W + oh * W + ow,
                                           (H, W))[valid]
                    C[rows, cols] += w[co, ci, kh, kw]
    bias = np.repeat(b, H * W)[None, :]
    return C, bias


def make_backprojection_matrix(angles, det_count, H, W):
    """Parallel-beam nearest-neighbor backprojection system matrix
    (n_angles*det_count, H*W) for the given angle values."""
    angles = np.asarray(angles, np.float64)
    n_angles = angles.shape[0]
    ys, xs = np.meshgrid(np.arange(H) - (H - 1) / 2.0,
                         np.arange(W) - (W - 1) / 2.0, indexing="ij")
    M = np.zeros((n_angles * det_count, H * W), np.float32)
    pix_ids = np.arange(H * W).reshape(H, W)
    for a, th in enumerate(angles):
        t = xs * np.cos(th) + ys * np.sin(th)
        d = np.rint(t + (det_count - 1) / 2.0).astype(np.int64)
        valid = (d >= 0) & (d < det_count)
        rows = a * det_count + d[valid]
        cols = pix_ids[valid]
        np.add.at(M, (rows, cols), 1.0)
    M *= np.pi / max(n_angles, 1)   # standard backprojection angular weighting
    return M


# ----------------------------------------------------------------------------
# TestNet
# ----------------------------------------------------------------------------
class TestNetPallas:
    def __init__(self, channels=3, key=None):
        if key is None:
            key = jax.random.PRNGKey(0)
        ks = jax.random.split(key, 6)

        def init_conv(kw, kb, cout, cin, k):
            # PyTorch Conv2d default init: U(-s, s), s = 1/sqrt(cin*k*k)
            s = 1.0 / np.sqrt(cin * k * k)
            w = jax.random.uniform(kw, (cout, cin, k, k), jnp.float32, -s, s)
            b = jax.random.uniform(kb, (cout,), jnp.float32, -s, s)
            return np.asarray(w), np.asarray(b)

        # sino_model: Conv2d(1, C, 5, pad=2) -> Conv2d(C, 1, 5, pad=2)
        self.w1, self.b1 = init_conv(ks[0], ks[1], channels, 1, 5)
        self.w2, self.b2 = init_conv(ks[2], ks[3], 1, channels, 5)
        # img_model: Conv2d(2, 1, 3, pad=1)
        self.w3, self.b3 = init_conv(ks[4], ks[5], 1, 2, 3)
        self.det_count = 672   # as in the reference module (toy bp uses sino's D)

        self._conv_cache = {}  # (tag, H, W) -> (C bf16 device, bias f32 device)
        self._bp_cache = {}    # (angles key, det, H, W) -> M bf16 device

    def _conv_ops(self, tag, w, b, H, W, padding):
        key = (tag, H, W)
        if key not in self._conv_cache:
            C, bias = conv2d_as_matrix(w, b, H, W, padding)
            self._conv_cache[key] = (jnp.asarray(C, MATMUL_DTYPE),
                                     jnp.asarray(bias, jnp.float32))
        return self._conv_cache[key]

    def _bp_matrix(self, angles, det_count, H, W):
        key = (tuple(np.round(np.asarray(angles, np.float64), 12).tolist()),
               det_count, H, W)
        if key not in self._bp_cache:
            M = make_backprojection_matrix(angles, det_count, H, W)
            self._bp_cache[key] = jnp.asarray(M, MATMUL_DTYPE)
        return self._bp_cache[key]

    def forward(self, sino, img_shape, angles=None):
        B, _, A, D = sino.shape
        H, W = img_shape[-2], img_shape[-1]
        if angles is None:
            # TODO(synk): reference defaults to 360 angles over 2*pi; at toy
            # sinogram sizes we use one angle per sinogram row instead.
            angles = np.linspace(0.0, 2.0 * np.pi, A, endpoint=False)
        angles = np.asarray(angles, np.float64)
        assert angles.shape[0] == A, "sinogram rows must match number of angles"

        c1, b1 = self._conv_ops("sino1", self.w1, self.b1, A, D, 2)
        c2, b2 = self._conv_ops("sino2", self.w2, self.b2, A, D, 2)
        c3, b3 = self._conv_ops("img", self.w3, self.b3, H, W, 1)
        m = self._bp_matrix(angles, D, H, W)

        sino_flat = sino.reshape(B, A * D).astype(jnp.float32)

        sino_pred, img_sino, img_pred = pl.pallas_call(
            _fused_forward_kernel,
            out_shape=(jax.ShapeDtypeStruct((B, A * D), jnp.float32),
                       jax.ShapeDtypeStruct((B, H * W), jnp.float32),
                       jax.ShapeDtypeStruct((B, H * W), jnp.float32)),
            in_specs=[VMEM_SPEC] * 8,
            out_specs=(VMEM_SPEC, VMEM_SPEC, VMEM_SPEC),
            scratch_shapes=[pltpu.VMEM((2 * B, A * D), jnp.float32),
                            pltpu.VMEM((B, 2 * H * W), jnp.float32)],
        )(sino_flat, c1, b1, c2, b2, c3, b3, m)

        return (sino_pred.reshape(B, 1, A, D),
                img_sino.reshape(B, 1, H, W),
                img_pred.reshape(B, 1, H, W))


# ----------------------------------------------------------------------------
if __name__ == "__main__":
    key = jax.random.PRNGKey(0)
    k_x, k_p = jax.random.split(key)

    # Small shapes: batch=2, 8 projection angles, 16 detector bins, 16x16 image.
    # A*D = 128 and H*W = 256 keep every activation slab lane-dense.
    B, A, D = 2, 8, 16
    H = W = 16

    sino = jax.random.normal(k_x, (B, 1, A, D), dtype=jnp.float32)

    net = TestNetPallas(channels=3, key=k_p)
    sino_pred, img_sino, img_pred = net.forward(sino, (H, W))
    jax.block_until_ready((sino_pred, img_sino, img_pred))

    assert sino_pred.shape == (B, 1, A, D)
    assert img_sino.shape == (B, 1, H, W)
    assert img_pred.shape == (B, 1, H, W)
    assert bool(jnp.all(jnp.isfinite(sino_pred)))
    assert bool(jnp.all(jnp.isfinite(img_sino)))
    assert bool(jnp.all(jnp.isfinite(img_pred)))

    print("KERNEL_OK")
</pallas_src>

<mosaic_0001>
module attributes {stable_mosaic.version = 11 : i64} {
  func.func @_fused_forward_kernel(%arg0: memref<2x128xf32, #tpu.memory_space<vmem>>, %arg1: memref<128x384xbf16, #tpu.memory_space<vmem>>, %arg2: memref<1x384xf32, #tpu.memory_space<vmem>>, %arg3: memref<384x128xbf16, #tpu.memory_space<vmem>>, %arg4: memref<1x128xf32, #tpu.memory_space<vmem>>, %arg5: memref<512x256xbf16, #tpu.memory_space<vmem>>, %arg6: memref<1x256xf32, #tpu.memory_space<vmem>>, %arg7: memref<128x256xbf16, #tpu.memory_space<vmem>>, %arg8: memref<2x128xf32, #tpu.memory_space<vmem>>, %arg9: memref<2x256xf32, #tpu.memory_space<vmem>>, %arg10: memref<2x256xf32, #tpu.memory_space<vmem>>, %arg11: memref<4x128xf32, #tpu.memory_space<vmem>>, %arg12: memref<2x512xf32, #tpu.memory_space<vmem>>) attributes {dimension_semantics = [], scalar_prefetch = 0 : i64, scratch_operands = 2 : i64, tpu.core_type = #tpu.core_type<tc>} {
    %c0 = arith.constant 0 : index
    %c0_0 = arith.constant 0 : index
    %0 = vector.load %arg0[%c0, %c0_0] : memref<2x128xf32, #tpu.memory_space<vmem>>, vector<2x128xf32>
    %1 = arith.truncf %0 : vector<2x128xf32> to vector<2x128xbf16>
    %c0_1 = arith.constant 0 : index
    %c0_2 = arith.constant 0 : index
    %2 = vector.load %arg1[%c0_1, %c0_2] : memref<128x384xbf16, #tpu.memory_space<vmem>>, vector<128x384xbf16>
    %cst = arith.constant dense<0.000000e+00> : vector<2x384xf32>
    %3 = tpu.matmul %1, %2, %cst {dimension_numbers = #tpu.dot_dimension_numbers<[1], [0], [0], [1], [0, 0, 1, 1], [], []>} : vector<2x128xbf16>, vector<128x384xbf16>, vector<2x384xf32> -> vector<2x384xf32>
    %c0_3 = arith.constant 0 : index
    %c0_4 = arith.constant 0 : index
    %4 = vector.load %arg2[%c0_3, %c0_4] : memref<1x384xf32, #tpu.memory_space<vmem>>, vector<1x384xf32>
    %5 = vector.broadcast %4 : vector<1x384xf32> to vector<2x384xf32>
    %6 = arith.addf %3, %5 : vector<2x384xf32>
    %7 = arith.truncf %6 : vector<2x384xf32> to vector<2x384xbf16>
    %c0_5 = arith.constant 0 : index
    %c0_6 = arith.constant 0 : index
    %8 = vector.load %arg3[%c0_5, %c0_6] : memref<384x128xbf16, #tpu.memory_space<vmem>>, vector<384x128xbf16>
    %cst_7 = arith.constant dense<0.000000e+00> : vector<2x128xf32>
    %9 = tpu.matmul %7, %8, %cst_7 {dimension_numbers = #tpu.dot_dimension_numbers<[1], [0], [0], [1], [0, 0, 1, 1], [], []>} : vector<2x384xbf16>, vector<384x128xbf16>, vector<2x128xf32> -> vector<2x128xf32>
    %c0_8 = arith.constant 0 : index
    %c0_9 = arith.constant 0 : index
    %10 = vector.load %arg4[%c0_8, %c0_9] : memref<1x128xf32, #tpu.memory_space<vmem>>, vector<1x128xf32>
    %11 = vector.broadcast %10 : vector<1x128xf32> to vector<2x128xf32>
    %12 = arith.addf %9, %11 : vector<2x128xf32>
    %c0_10 = arith.constant 0 : index
    %c0_11 = arith.constant 0 : index
    %13 = vector.load %arg8[%c0_10, %c0_11] : memref<2x128xf32, #tpu.memory_space<vmem>>, vector<2x128xf32>
    tpu.vector_store %arg8[%c0_10, %c0_11], %12 {strides = array<i32>} : memref<2x128xf32, #tpu.memory_space<vmem>>, vector<2x128xf32>,
    %c0_12 = arith.constant 0 : index
    %c0_13 = arith.constant 0 : index
    %14 = vector.load %arg11[%c0_12, %c0_13] : memref<4x128xf32, #tpu.memory_space<vmem>>, vector<2x128xf32>
    tpu.vector_store %arg11[%c0_12, %c0_13], %0 {strides = array<i32>} : memref<4x128xf32, #tpu.memory_space<vmem>>, vector<2x128xf32>,
    %c2 = arith.constant 2 : index
    %c0_14 = arith.constant 0 : index
    %15 = vector.load %arg11[%c2, %c0_14] : memref<4x128xf32, #tpu.memory_space<vmem>>, vector<2x128xf32>
    tpu.vector_store %arg11[%c2, %c0_14], %12 {strides = array<i32>} : memref<4x128xf32, #tpu.memory_space<vmem>>, vector<2x128xf32>,
    %c0_15 = arith.constant 0 : index
    %c0_16 = arith.constant 0 : index
    %16 = vector.load %arg11[%c0_15, %c0_16] : memref<4x128xf32, #tpu.memory_space<vmem>>, vector<4x128xf32>
    %17 = arith.truncf %16 : vector<4x128xf32> to vector<4x128xbf16>
    %c0_17 = arith.constant 0 : index
    %c0_18 = arith.constant 0 : index
    %18 = vector.load %arg7[%c0_17, %c0_18] : memref<128x256xbf16, #tpu.memory_space<vmem>>, vector<128x256xbf16>
    %cst_19 = arith.constant dense<0.000000e+00> : vector<4x256xf32>
    %19 = tpu.matmul %17, %18, %cst_19 {dimension_numbers = #tpu.dot_dimension_numbers<[1], [0], [0], [1], [0, 0, 1, 1], [], []>} : vector<4x128xbf16>, vector<128x256xbf16>, vector<4x256xf32> -> vector<4x256xf32>
    %20 = vector.extract_strided_slice %19 {offsets = [2, 0], sizes = [2, 256], strides = [1, 1]} : vector<4x256xf32> to vector<2x256xf32>
    %c0_20 = arith.constant 0 : index
    %c0_21 = arith.constant 0 : index
    %21 = vector.load %arg9[%c0_20, %c0_21] : memref<2x256xf32, #tpu.memory_space<vmem>>, vector<2x256xf32>
    tpu.vector_store %arg9[%c0_20, %c0_21], %20 {strides = array<i32>} : memref<2x256xf32, #tpu.memory_space<vmem>>, vector<2x256xf32>,
    %22 = vector.extract_strided_slice %19 {offsets = [0, 0], sizes = [2, 256], strides = [1, 1]} : vector<4x256xf32> to vector<2x256xf32>
    %c0_22 = arith.constant 0 : index
    %c0_23 = arith.constant 0 : index
    %23 = vector.load %arg12[%c0_22, %c0_23] : memref<2x512xf32, #tpu.memory_space<vmem>>, vector<2x256xf32>
    tpu.vector_store %arg12[%c0_22, %c0_23], %22 {strides = array<i32>} : memref<2x512xf32, #tpu.memory_space<vmem>>, vector<2x256xf32>,
    %c0_24 = arith.constant 0 : index
    %c256 = arith.constant 256 : index
    %24 = vector.load %arg12[%c0_24, %c256] : memref<2x512xf32, #tpu.memory_space<vmem>>, vector<2x256xf32>
    tpu.vector_store %arg12[%c0_24, %c256], %20 {strides = array<i32>} : memref<2x512xf32, #tpu.memory_space<vmem>>, vector<2x256xf32>,
    %c0_25 = arith.constant 0 : index
    %c0_26 = arith.constant 0 : index
    %25 = vector.load %arg12[%c0_25, %c0_26] : memref<2x512xf32, #tpu.memory_space<vmem>>, vector<2x512xf32>
    %26 = arith.truncf %25 : vector<2x512xf32> to vector<2x512xbf16>
    %c0_27 = arith.constant 0 : index
    %c0_28 = arith.constant 0 : index
    %27 = vector.load %arg5[%c0_27, %c0_28] : memref<512x256xbf16, #tpu.memory_space<vmem>>, vector<512x256xbf16>
    %cst_29 = arith.constant dense<0.000000e+00> : vector<2x256xf32>
    %28 = tpu.matmul %26, %27, %cst_29 {dimension_numbers = #tpu.dot_dimension_numbers<[1], [0], [0], [1], [0, 0, 1, 1], [], []>} : vector<2x512xbf16>, vector<512x256xbf16>, vector<2x256xf32> -> vector<2x256xf32>
    %c0_30 = arith.constant 0 : index
    %c0_31 = arith.constant 0 : index
    %29 = vector.load %arg6[%c0_30, %c0_31] : memref<1x256xf32, #tpu.memory_space<vmem>>, vector<1x256xf32>
    %30 = vector.broadcast %29 : vector<1x256xf32> to vector<2x256xf32>
    %31 = arith.addf %28, %30 : vector<2x256xf32>
    %c0_32 = arith.constant 0 : index
    %c0_33 = arith.constant 0 : index
    %32 = vector.load %arg10[%c0_32, %c0_33] : memref<2x256xf32, #tpu.memory_space<vmem>>, vector<2x256xf32>
    tpu.vector_store %arg10[%c0_32, %c0_33], %31 {strides = array<i32>} : memref<2x256xf32, #tpu.memory_space<vmem>>, vector<2x256xf32>,
    return
  }
}

</mosaic_0001>

<llo_original>
// kernel: tpu_custom_call.1
$region0: #{tpu_custom_call.1}
  #allocation0 [shape = 'u32[]', space=smem, size = 0x4, offset = 0x4, fixed_abs, tag = 'smem constant byte address 0x4 - core index']
  #allocation1 [shape = 'u32[144,128]{1,0:T(1,128)}', space=vmem, size = 0x12000, scoped, tag = 'internal scratch']
  #allocation2 [shape = 'f32[4,128]{1,0:T(4,128)}', space=vmem, size = 0x800, scoped, tag = 'scratch operand']
  #allocation3 [shape = 'f32[2,512]{1,0:T(2,128)}', space=vmem, size = 0x1000, scoped, tag = 'scratch operand']
  %s0 = inlined_call_operand.hbm [shape: f32[2,128], index: 0, kind: input, shape index: {}]
  %s1 = inlined_call_operand.hbm [shape: bf16[128,384], index: 1, kind: input, shape index: {}]
  %s2 = inlined_call_operand.vmem [shape: f32[1,384], index: 2, kind: input, shape index: {}]
  %s3 = inlined_call_operand.hbm [shape: bf16[384,128], index: 3, kind: input, shape index: {}]
  %s4 = inlined_call_operand.vmem [shape: f32[1,128], index: 4, kind: input, shape index: {}]
  %s5 = inlined_call_operand.hbm [shape: bf16[512,256], index: 5, kind: input, shape index: {}]
  %s6 = inlined_call_operand.vmem [shape: f32[1,256], index: 6, kind: input, shape index: {}]
  %s7 = inlined_call_operand.hbm [shape: bf16[128,256], index: 7, kind: input, shape index: {}]
  %s8 = inlined_call_operand.hbm [shape: f32[2,128], index: 8, kind: output, shape index: {0}]
  %s9 = inlined_call_operand.hbm [shape: f32[2,256], index: 9, kind: output, shape index: {1}]
  %s10 = inlined_call_operand.hbm [shape: f32[2,256], index: 10, kind: output, shape index: {2}]
  %11 = xla_tuple %s8, %s9, %s10
  %s12 = sld [smem:[#allocation0]]
  $region78: #{tpu_custom_call.1} parent=0
    _
  %s14 = ssub.s32 1, %s12
  %s15 = scalar_select 0, %s14, %s12
  $region1: #{tpu_custom_call.1} parent=0
    #allocation4 [shape = 'u8[1024]{0}', space=vmem, size = 0x400, scoped, tag = 'input window, operand 0, single buffered']
    #allocation5 [shape = 's32[1]{0}', space=sflag, size = 0x4, scoped, tag = 'scoped memory for tpu_custom_call.1']
    #allocation6 [shape = 's32[1]{0}', space=sflag, size = 0x4, scoped, tag = 'scoped memory for tpu_custom_call.1']
    #allocation7 [shape = 'u8[98304]{0}', space=vmem, size = 0x18000, scoped, tag = 'input window, operand 1, single buffered']
    #allocation8 [shape = 's32[1]{0}', space=sflag, size = 0x4, scoped, tag = 'scoped memory for tpu_custom_call.1']
    #allocation9 [shape = 'u8[98304]{0}', space=vmem, size = 0x18000, scoped, tag = 'input window, operand 3, single buffered']
    #allocation10 [shape = 'u8[262144]{0}', space=vmem, size = 0x40000, scoped, tag = 'input window, operand 5, single buffered']
    #allocation11 [shape = 's32[1]{0}', space=sflag, size = 0x4, scoped, tag = 'scoped memory for tpu_custom_call.1']
    #allocation12 [shape = 'u8[65536]{0}', space=vmem, size = 0x10000, scoped, tag = 'input window, operand 7, single buffered']
    #allocation13 [shape = 'u8[1024]{0}', space=vmem, size = 0x400, scoped, tag = 'output window, operand 0, single buffered']
    #allocation14 [shape = 'u8[2048]{0}', space=vmem, size = 0x800, scoped, tag = 'output window, operand 1, single buffered']
    #allocation15 [shape = 's32[1]{0}', space=sflag, size = 0x4, scoped, tag = 'scoped memory for tpu_custom_call.1']
    #allocation16 [shape = 'u8[2048]{0}', space=vmem, size = 0x800, scoped, tag = 'output window, operand 2, single buffered']
    %16 = vsyncpa [#allocation5], 0
    %17 = vsyncpa [#allocation8], 0
    %18 = vsyncpa [#allocation11], 0
    %19 = vsyncpa [#allocation6], 0
    %20 = vsyncpa [#allocation15], 0
    // Predicated region
    $region2: #{tpu_custom_call.1} parent=1 // pred_check
      _
    $region3: #{tpu_custom_call.1} parent=1 // pred_check_branch
      %22 = sbr.rel (0) target = $region5
    $region4: #{tpu_custom_call.1} parent=1 // pred_region
      %s24 = ssub.s32 32, 32
      %25 = vsyncadd [#allocation5], %s24
      %s27 = sshll.u32 [#allocation4], 4
      %s28 = int_to_ptr.vmem [resolvable:$true] %s27
      %30 = dma.hbm_to_vmem [thread:$0]  %s0, 32, %s28, [#allocation5]
    $region5: #{tpu_custom_call.1} parent=1 // pred_fallthru
      _
    // Predicated region
    $region6: #{tpu_custom_call.1} parent=1 // pred_check
      _
    $region7: #{tpu_custom_call.1} parent=1 // pred_check_branch
      %32 = sbr.rel (0) target = $region9
    $region8: #{tpu_custom_call.1} parent=1 // pred_region
      %s34 = ssub.s32 3072, 3072
      %35 = vsyncadd [#allocation8], %s34
      %s36 = sshll.u32 [#allocation7], 4
      %s37 = int_to_ptr.vmem [resolvable:$true] %s36
      %42 = dma.hbm_to_vmem [thread:$0]  %s1, 3072, %s37, [#allocation8], 192, 192, 12
    $region9: #{tpu_custom_call.1} parent=1 // pred_fallthru
      _
    // Predicated region
    $region10: #{tpu_custom_call.1} parent=1 // pred_check
      _
    $region11: #{tpu_custom_call.1} parent=1 // pred_check_branch
      %44 = sbr.rel (0) target = $region13
    $region12: #{tpu_custom_call.1} parent=1 // pred_region
      _
    $region13: #{tpu_custom_call.1} parent=1 // pred_fallthru
      _
    // Predicated region
    $region14: #{tpu_custom_call.1} parent=1 // pred_check
      _
    $region15: #{tpu_custom_call.1} parent=1 // pred_check_branch
      %46 = sbr.rel (0) target = $region17
    $region16: #{tpu_custom_call.1} parent=1 // pred_region
      %s48 = ssub.s32 3072, 3072
      %49 = vsyncadd [#allocation8], %s48
      %s50 = sshll.u32 [#allocation9], 4
      %s51 = int_to_ptr.vmem [resolvable:$true] %s50
      %56 = dma.hbm_to_vmem [thread:$0]  %s3, 3072, %s51, [#allocation8], 64, 64, 4
    $region17: #{tpu_custom_call.1} parent=1 // pred_fallthru
      _
    // Predicated region
    $region18: #{tpu_custom_call.1} parent=1 // pred_check
      _
    $region19: #{tpu_custom_call.1} parent=1 // pred_check_branch
      %58 = sbr.rel (0) target = $region21
    $region20: #{tpu_custom_call.1} parent=1 // pred_region
      _
    $region21: #{tpu_custom_call.1} parent=1 // pred_fallthru
      _
    // Predicated region
    $region22: #{tpu_custom_call.1} parent=1 // pred_check
      _
    $region23: #{tpu_custom_call.1} parent=1 // pred_check_branch
      %60 = sbr.rel (0) target = $region25
    $region24: #{tpu_custom_call.1} parent=1 // pred_region
      %s62 = ssub.s32 8192, 8192
      %63 = vsyncadd [#allocation11], %s62
      %s64 = sshll.u32 [#allocation10], 4
      %s65 = int_to_ptr.vmem [resolvable:$true] %s64
      %70 = dma.hbm_to_vmem [thread:$0]  %s5, 8192, %s65, [#allocation11], 128, 128, 8
    $region25: #{tpu_custom_call.1} parent=1 // pred_fallthru
      _
    // Predicated region
    $region26: #{tpu_custom_call.1} parent=1 // pred_check
      _
    $region27: #{tpu_custom_call.1} parent=1 // pred_check_branch
      %72 = sbr.rel (0) target = $region29
    $region28: #{tpu_custom_call.1} parent=1 // pred_region
      _
    $region29: #{tpu_custom_call.1} parent=1 // pred_fallthru
      _
    // Predicated region
    $region30: #{tpu_custom_call.1} parent=1 // pred_check
      _
    $region31: #{tpu_custom_call.1} parent=1 // pred_check_branch
      %74 = sbr.rel (0) target = $region33
    $region32: #{tpu_custom_call.1} parent=1 // pred_region
      %s76 = ssub.s32 2048, 2048
      %77 = vsyncadd [#allocation11], %s76
      %s78 = sshll.u32 [#allocation12], 4
      %s79 = int_to_ptr.vmem [resolvable:$true] %s78
      %84 = dma.hbm_to_vmem [thread:$0]  %s7, 2048, %s79, [#allocation11], 128, 128, 8
    $region33: #{tpu_custom_call.1} parent=1 // pred_fallthru
      _
    // Predicated region
    $region34: #{tpu_custom_call.1} parent=1 // pred_check
      _
    $region35: #{tpu_custom_call.1} parent=1 // pred_check_branch
      %86 = sbr.rel (0) target = $region37
    $region36: #{tpu_custom_call.1} parent=1 // pred_region
      %87 = dma.done [#allocation5], 32
    $region37: #{tpu_custom_call.1} parent=1 // pred_fallthru
      _
    // Predicated region
    $region38: #{tpu_custom_call.1} parent=1 // pred_check
      _
    $region39: #{tpu_custom_call.1} parent=1 // pred_check_branch
      %89 = sbr.rel (0) target = $region41
    $region40: #{tpu_custom_call.1} parent=1 // pred_region
      %90 = dma.done [#allocation8], 3072
    $region41: #{tpu_custom_call.1} parent=1 // pred_fallthru
      _
    // Predicated region
    $region42: #{tpu_custom_call.1} parent=1 // pred_check
      _
    $region43: #{tpu_custom_call.1} parent=1 // pred_check_branch
      %92 = sbr.rel (0) target = $region45
    $region44: #{tpu_custom_call.1} parent=1 // pred_region
      %93 = dma.done [#allocation8], 3072
    $region45: #{tpu_custom_call.1} parent=1 // pred_fallthru
      _
    // Predicated region
    $region46: #{tpu_custom_call.1} parent=1 // pred_check
      _
    $region47: #{tpu_custom_call.1} parent=1 // pred_check_branch
      %95 = sbr.rel (0) target = $region49
    $region48: #{tpu_custom_call.1} parent=1 // pred_region
      %96 = dma.done [#allocation11], 8192
    $region49: #{tpu_custom_call.1} parent=1 // pred_fallthru
      _
    // Predicated region
    $region50: #{tpu_custom_call.1} parent=1 // pred_check
      _
    $region51: #{tpu_custom_call.1} parent=1 // pred_check_branch
      %98 = sbr.rel (0) target = $region53
    $region52: #{tpu_custom_call.1} parent=1 // pred_region
      %99 = dma.done [#allocation11], 2048
    $region53: #{tpu_custom_call.1} parent=1 // pred_fallthru
      _
    %v101 = vld [vmem:[#allocation4] sm:$0x3]
    %v102 = vpack.c.bf16 %v101, %v101
    %v103 = vld [vmem:[#allocation7] sm:$0xff]
    %v104 = vld [vmem:[#allocation7 + $0x8] sm:$0xf]
    %v105 = vld [vmem:[#allocation7 + $0xc] sm:$0xff]
    %v106 = vld [vmem:[#allocation7 + $0x14] sm:$0xf]
    %v107 = vld [vmem:[#allocation7 + $0x18] sm:$0xff]
    %v108 = vld [vmem:[#allocation7 + $0x20] sm:$0xf]
    %v109 = vld [vmem:[#allocation7 + $0x24] sm:$0xff]
    %v110 = vld [vmem:[#allocation7 + $0x2c] sm:$0xf]
    %v111 = vld [vmem:[#allocation7 + $0x30] sm:$0xff]
    %v112 = vld [vmem:[#allocation7 + $0x38] sm:$0xf]
    %v113 = vld [vmem:[#allocation7 + $0x3c] sm:$0xff]
    %v114 = vld [vmem:[#allocation7 + $0x44] sm:$0xf]
    %v115 = vld [vmem:[#allocation7 + $0x48] sm:$0xff]
    %v116 = vld [vmem:[#allocation7 + $0x50] sm:$0xf]
    %v117 = vld [vmem:[#allocation7 + $0x54] sm:$0xff]
    %v118 = vld [vmem:[#allocation7 + $0x5c] sm:$0xf]
    %v119 = vld [vmem:[#allocation7 + $0x60] sm:$0xff]
    %v120 = vld [vmem:[#allocation7 + $0x68] sm:$0xf]
    %v121 = vld [vmem:[#allocation7 + $0x6c] sm:$0xff]
    %v122 = vld [vmem:[#allocation7 + $0x74] sm:$0xf]
    %v123 = vld [vmem:[#allocation7 + $0x78] sm:$0xff]
    %v124 = vld [vmem:[#allocation7 + $0x80] sm:$0xf]
    %v125 = vld [vmem:[#allocation7 + $0x84] sm:$0xff]
    %v126 = vld [vmem:[#allocation7 + $0x8c] sm:$0xf]
    %v127 = vld [vmem:[#allocation7 + $0x90] sm:$0xff]
    %v128 = vld [vmem:[#allocation7 + $0x98] sm:$0xf]
    %v129 = vld [vmem:[#allocation7 + $0x9c] sm:$0xff]
    %v130 = vld [vmem:[#allocation7 + $0xa4] sm:$0xf]
    %v131 = vld [vmem:[#allocation7 + $0xa8] sm:$0xff]
    %v132 = vld [vmem:[#allocation7 + $0xb0] sm:$0xf]
    %v133 = vld [vmem:[#allocation7 + $0xb4] sm:$0xff]
    %v134 = vld [vmem:[#allocation7 + $0xbc] sm:$0xf]
    %v135 = vld [vmem:[%s2] sm:$0x7]
    %v137 = vlaneseq
    %v138 = vshrl.u32 %v137, 7
    %v139 = vsub.s32 0, %v138
    %v140 = vrot.slane %v135, %v139
    %v141 = vlaneseq
    %v142 = vshrl.u32 %v141, 7
    %v143 = vsub.s32 1, %v142
    %v144 = vrot.slane %v135, %v143
    %v145 = vlaneseq
    %v146 = vshrl.u32 %v145, 7
    %v147 = vsub.s32 2, %v146
    %v148 = vrot.slane %v135, %v147
    %v184 = vunpack.c.l.b16 %v103
    %v185 = vunpack.c.h.b16 %v103
    %v186 = vunpack.c.l.b16 %v104
    %v187 = vunpack.c.l.b16 %v105
    %v188 = vunpack.c.h.b16 %v105
    %v189 = vunpack.c.l.b16 %v106
    %v190 = vunpack.c.l.b16 %v107
    %v191 = vunpack.c.h.b16 %v107
    %v192 = vunpack.c.l.b16 %v108
    %v193 = vunpack.c.l.b16 %v109
    %v194 = vunpack.c.h.b16 %v109
    %v195 = vunpack.c.l.b16 %v110
    %v196 = vunpack.c.l.b16 %v111
    %v197 = vunpack.c.h.b16 %v111
    %v198 = vunpack.c.l.b16 %v112
    %v199 = vunpack.c.l.b16 %v113
    %v200 = vunpack.c.h.b16 %v113
    %v201 = vunpack.c.l.b16 %v114
    %v202 = vunpack.c.l.b16 %v115
    %v203 = vunpack.c.h.b16 %v115
    %v204 = vunpack.c.l.b16 %v116
    %v205 = vunpack.c.l.b16 %v117
    %v206 = vunpack.c.h.b16 %v117
    %v207 = vunpack.c.l.b16 %v118
    %v208 = vunpack.c.l.b16 %v119
    %v209 = vunpack.c.h.b16 %v119
    %v210 = vunpack.c.l.b16 %v120
    %v211 = vunpack.c.l.b16 %v121
    %v212 = vunpack.c.h.b16 %v121
    %v213 = vunpack.c.l.b16 %v122
    %v214 = vunpack.c.l.b16 %v123
    %v215 = vunpack.c.h.b16 %v123
    %v216 = vunpack.c.l.b16 %v124
    %v217 = vunpack.c.l.b16 %v125
    %v218 = vunpack.c.h.b16 %v125
    %v219 = vunpack.c.l.b16 %v126
    %v220 = vunpack.c.l.b16 %v127
    %v221 = vunpack.c.h.b16 %v127
    %v222 = vunpack.c.l.b16 %v128
    %v223 = vunpack.c.l.b16 %v129
    %v224 = vunpack.c.h.b16 %v129
    %v225 = vunpack.c.l.b16 %v130
    %v226 = vunpack.c.l.b16 %v131
    %v227 = vunpack.c.h.b16 %v131
    %v228 = vunpack.c.l.b16 %v132
    %v229 = vunpack.c.l.b16 %v133
    %v230 = vunpack.c.h.b16 %v133
    %v231 = vunpack.c.l.b16 %v134
    %v232 = vpack.c.b16 %v187, %v184
    %v233 = vpack.c.b16 %v188, %v185
    %v234 = vpack.c.b16 %v189, %v186
    %v235 = vpack.c.b16 %v193, %v190
    %v236 = vpack.c.b16 %v194, %v191
    %v237 = vpack.c.b16 %v195, %v192
    %v238 = vpack.c.b16 %v199, %v196
    %v239 = vpack.c.b16 %v200, %v197
    %v240 = vpack.c.b16 %v201, %v198
    %v241 = vpack.c.b16 %v205, %v202
    %v242 = vpack.c.b16 %v206, %v203
    %v243 = vpack.c.b16 %v207, %v204
    %v244 = vpack.c.b16 %v211, %v208
    %v245 = vpack.c.b16 %v212, %v209
    %v246 = vpack.c.b16 %v213, %v210
    %v247 = vpack.c.b16 %v217, %v214
    %v248 = vpack.c.b16 %v218, %v215
    %v249 = vpack.c.b16 %v219, %v216
    %v250 = vpack.c.b16 %v223, %v220
    %v251 = vpack.c.b16 %v224, %v221
    %v252 = vpack.c.b16 %v225, %v222
    %v253 = vpack.c.b16 %v229, %v226
    %v254 = vpack.c.b16 %v230, %v227
    %v255 = vpack.c.b16 %v231, %v228
    %280 = vmatprep.subr.bf16.mxu0 %v233
    %281 = vmatpush1.bf16.msra.mxu0 %v232
    %282 = vmatprep.subr.bf16.mxu0 %v236
    %283 = vmatpush1.bf16.msra.mxu0 %v235
    %284 = vmatprep.subr.bf16.mxu0 %v239
    %285 = vmatpush1.bf16.msra.mxu0 %v238
    %286 = vmatprep.subr.bf16.mxu0 %v242
    %287 = vmatpush1.bf16.msra.mxu0 %v241
    %288 = vmatprep.subr.bf16.mxu0 %v245
    %289 = vmatpush1.bf16.msra.mxu0 %v244
    %290 = vmatprep.subr.bf16.mxu0 %v248
    %291 = vmatpush1.bf16.msra.mxu0 %v247
    %292 = vmatprep.subr.bf16.mxu0 %v251
    %293 = vmatpush1.bf16.msra.mxu0 %v250
    %294 = vmatprep.subr.bf16.mxu0 %v254
    %295 = vmatpush1.bf16.msra.mxu0 %v253
    %296 = vmatprep.subr.bf16.mxu0 0
    %297 = vmatpush1.bf16.msra.mxu0 0
    %298 = vmatprep.subr.bf16.mxu0 0
    %299 = vmatpush1.bf16.msra.mxu0 0
    %300 = vmatprep.subr.bf16.mxu0 0
    %301 = vmatpush1.bf16.msra.mxu0 0
    %302 = vmatprep.subr.bf16.mxu0 0
    %303 = vmatpush1.bf16.msra.mxu0 0
    %304 = vmatprep.subr.bf16.mxu0 0
    %305 = vmatpush1.bf16.msra.mxu0 0
    %306 = vmatprep.subr.bf16.mxu0 0
    %307 = vmatpush1.bf16.msra.mxu0 0
    %308 = vmatprep.subr.bf16.mxu0 0
    %309 = vmatpush1.bf16.msra.mxu0 0
    %310 = vmatprep.subr.bf16.mxu0 0
    %311 = vmatpush1.bf16.msra.mxu0 0
    %312 = vmatprep.mubr.bf16.mxu0 0
    %313 = vmatmul.mubr.bf16.gmra.mrb[0].mxu0 %v102
    %v314 = vpop.f32.mrb[0].mxu0
    %v315 = vadd.f32 %v140, %v314
    %v316 = vpop.f32.mrb[0].mxu0
    %v317 = vadd.f32 %v144, %v316
    %v318 = vpop.f32.mrb[0].mxu0
    %v319 = vpop.f32.mrb[0].mxu0
    %320 = vdwg.mxu0
    %321 = vmatprep.subr.bf16.mxu0 0
    %322 = vmatpush1.bf16.msra.mxu0 %v234
    %323 = vmatprep.subr.bf16.mxu0 0
    %324 = vmatpush1.bf16.msra.mxu0 %v237
    %325 = vmatprep.subr.bf16.mxu0 0
    %326 = vmatpush1.bf16.msra.mxu0 %v240
    %327 = vmatprep.subr.bf16.mxu0 0
    %328 = vmatpush1.bf16.msra.mxu0 %v243
    %329 = vmatprep.subr.bf16.mxu0 0
    %330 = vmatpush1.bf16.msra.mxu0 %v246
    %331 = vmatprep.subr.bf16.mxu0 0
    %332 = vmatpush1.bf16.msra.mxu0 %v249
    %333 = vmatprep.subr.bf16.mxu0 0
    %334 = vmatpush1.bf16.msra.mxu0 %v252
    %335 = vmatprep.subr.bf16.mxu0 0
    %336 = vmatpush1.bf16.msra.mxu0 %v255
    %337 = vmatprep.subr.bf16.mxu0 0
    %338 = vmatpush1.bf16.msra.mxu0 0
    %339 = vmatprep.subr.bf16.mxu0 0
    %340 = vmatpush1.bf16.msra.mxu0 0
    %341 = vmatprep.subr.bf16.mxu0 0
    %342 = vmatpush1.bf16.msra.mxu0 0
    %343 = vmatprep.subr.bf16.mxu0 0
    %344 = vmatpush1.bf16.msra.mxu0 0
    %345 = vmatprep.subr.bf16.mxu0 0
    %346 = vmatpush1.bf16.msra.mxu0 0
    %347 = vmatprep.subr.bf16.mxu0 0
    %348 = vmatpush1.bf16.msra.mxu0 0
    %349 = vmatprep.subr.bf16.mxu0 0
    %350 = vmatpush1.bf16.msra.mxu0 0
    %351 = vmatprep.subr.bf16.mxu0 0
    %352 = vmatpush1.bf16.msra.mxu0 0
    %353 = vmatprep.mubr.bf16.mxu0 0
    %354 = vmatmul.mubr.bf16.gmra.mrb[0].mxu0 %v102
    %v355 = vpop.f32.mrb[0].mxu0
    %v356 = vadd.f32 %v148, %v355
    %v357 = vpop.f32.mrb[0].mxu0
    %v358 = vpop.f32.mrb[0].mxu0
    %v359 = vpop.f32.mrb[0].mxu0
    %360 = vdwg.mxu0
    %v361 = vpack.c.bf16 %v315, %v315
    %v362 = vpack.c.bf16 %v317, %v317
    %v363 = vpack.c.bf16 %v356, %v356
    %v364 = vld [vmem:[#allocation9] sm:$0xf]
    %v365 = vld [vmem:[#allocation9 + $0x4] sm:$0xf]
    %v366 = vld [vmem:[#allocation9 + $0x8] sm:$0xf]
    %v367 = vld [vmem:[#allocation9 + $0xc] sm:$0xf]
    %v368 = vld [vmem:[#allocation9 + $0x10] sm:$0xf]
    %v369 = vld [vmem:[#allocation9 + $0x14] sm:$0xf]
    %v370 = vld [vmem:[#allocation9 + $0x18] sm:$0xf]
    %v371 = vld [vmem:[#allocation9 + $0x1c] sm:$0xf]
    %v372 = vld [vmem:[#allocation9 + $0x20] sm:$0xf]
    %v373 = vld [vmem:[#allocation9 + $0x24] sm:$0xf]
    %v374 = vld [vmem:[#allocation9 + $0x28] sm:$0xf]
    %v375 = vld [vmem:[#allocation9 + $0x2c] sm:$0xf]
    %v376 = vld [vmem:[#allocation9 + $0x30] sm:$0xf]
    %v377 = vld [vmem:[#allocation9 + $0x34] sm:$0xf]
    %v378 = vld [vmem:[#allocation9 + $0x38] sm:$0xf]
    %v379 = vld [vmem:[#allocation9 + $0x3c] sm:$0xf]
    %v380 = vld [vmem:[#allocation9 + $0x40] sm:$0xf]
    %v381 = vld [vmem:[#allocation9 + $0x44] sm:$0xf]
    %v382 = vld [vmem:[#allocation9 + $0x48] sm:$0xf]
    %v383 = vld [vmem:[#allocation9 + $0x4c] sm:$0xf]
    %v384 = vld [vmem:[#allocation9 + $0x50] sm:$0xf]
    %v385 = vld [vmem:[#allocation9 + $0x54] sm:$0xf]
    %v386 = vld [vmem:[#allocation9 + $0x58] sm:$0xf]
    %v387 = vld [vmem:[#allocation9 + $0x5c] sm:$0xf]
    %v388 = vld [vmem:[#allocation9 + $0x60] sm:$0xf]
    %v389 = vld [vmem:[#allocation9 + $0x64] sm:$0xf]
    %v390 = vld [vmem:[#allocation9 + $0x68] sm:$0xf]
    %v391 = vld [vmem:[#allocation9 + $0x6c] sm:$0xf]
    %v392 = vld [vmem:[#allocation9 + $0x70] sm:$0xf]
    %v393 = vld [vmem:[#allocation9 + $0x74] sm:$0xf]
    %v394 = vld [vmem:[#allocation9 + $0x78] sm:$0xf]
    %v395 = vld [vmem:[#allocation9 + $0x7c] sm:$0xf]
    %v396 = vld [vmem:[#allocation9 + $0x80] sm:$0xf]
    %v397 = vld [vmem:[#allocation9 + $0x84] sm:$0xf]
    %v398 = vld [vmem:[#allocation9 + $0x88] sm:$0xf]
    %v399 = vld [vmem:[#allocation9 + $0x8c] sm:$0xf]
    %v400 = vld [vmem:[#allocation9 + $0x90] sm:$0xf]
    %v401 = vld [vmem:[#allocation9 + $0x94] sm:$0xf]
    %v402 = vld [vmem:[#allocation9 + $0x98] sm:$0xf]
    %v403 = vld [vmem:[#allocation9 + $0x9c] sm:$0xf]
    %v404 = vld [vmem:[#allocation9 + $0xa0] sm:$0xf]
    %v405 = vld [vmem:[#allocation9 + $0xa4] sm:$0xf]
    %v406 = vld [vmem:[#allocation9 + $0xa8] sm:$0xf]
    %v407 = vld [vmem:[#allocation9 + $0xac] sm:$0xf]
    %v408 = vld [vmem:[#allocation9 + $0xb0] sm:$0xf]
    %v409 = vld [vmem:[#allocation9 + $0xb4] sm:$0xf]
    %v410 = vld [vmem:[#allocation9 + $0xb8] sm:$0xf]
    %v411 = vld [vmem:[#allocation9 + $0xbc] sm:$0xf]
    %v412 = vld [vmem:[%s4] sm:$0x1]
    %v414 = vlaneseq
    %v415 = vshrl.u32 %v414, 7
    %v416 = vsub.s32 0, %v415
    %v417 = vrot.slane %v412, %v416
    %v467 = vunpack.c.l.b16 %v364
    %v468 = vunpack.c.l.b16 %v365
    %v469 = vunpack.c.l.b16 %v366
    %v470 = vunpack.c.l.b16 %v367
    %v471 = vunpack.c.l.b16 %v368
    %v472 = vunpack.c.l.b16 %v369
    %v473 = vunpack.c.l.b16 %v370
    %v474 = vunpack.c.l.b16 %v371
    %v475 = vunpack.c.l.b16 %v372
    %v476 = vunpack.c.l.b16 %v373
    %v477 = vunpack.c.l.b16 %v374
    %v478 = vunpack.c.l.b16 %v375
    %v479 = vunpack.c.l.b16 %v376
    %v480 = vunpack.c.l.b16 %v377
    %v481 = vunpack.c.l.b16 %v378
    %v482 = vunpack.c.l.b16 %v379
    %v483 = vunpack.c.l.b16 %v380
    %v484 = vunpack.c.l.b16 %v381
    %v485 = vunpack.c.l.b16 %v382
    %v486 = vunpack.c.l.b16 %v383
    %v487 = vunpack.c.l.b16 %v384
    %v488 = vunpack.c.l.b16 %v385
    %v489 = vunpack.c.l.b16 %v386
    %v490 = vunpack.c.l.b16 %v387
    %v491 = vunpack.c.l.b16 %v388
    %v492 = vunpack.c.l.b16 %v389
    %v493 = vunpack.c.l.b16 %v390
    %v494 = vunpack.c.l.b16 %v391
    %v495 = vunpack.c.l.b16 %v392
    %v496 = vunpack.c.l.b16 %v393
    %v497 = vunpack.c.l.b16 %v394
    %v498 = vunpack.c.l.b16 %v395
    %v499 = vunpack.c.l.b16 %v396
    %v500 = vunpack.c.l.b16 %v397
    %v501 = vunpack.c.l.b16 %v398
    %v502 = vunpack.c.l.b16 %v399
    %v503 = vunpack.c.l.b16 %v400
    %v504 = vunpack.c.l.b16 %v401
    %v505 = vunpack.c.l.b16 %v402
    %v506 = vunpack.c.l.b16 %v403
    %v507 = vunpack.c.l.b16 %v404
    %v508 = vunpack.c.l.b16 %v405
    %v509 = vunpack.c.l.b16 %v406
    %v510 = vunpack.c.l.b16 %v407
    %v511 = vunpack.c.l.b16 %v408
    %v512 = vunpack.c.l.b16 %v409
    %v513 = vunpack.c.l.b16 %v410
    %v514 = vunpack.c.l.b16 %v411
    %v515 = vpack.c.b16 %v468, %v467
    %v516 = vpack.c.b16 %v470, %v469
    %v517 = vpack.c.b16 %v472, %v471
    %v518 = vpack.c.b16 %v474, %v473
    %v519 = vpack.c.b16 %v476, %v475
    %v520 = vpack.c.b16 %v478, %v477
    %v521 = vpack.c.b16 %v480, %v479
    %v522 = vpack.c.b16 %v482, %v481
    %v523 = vpack.c.b16 %v484, %v483
    %v524 = vpack.c.b16 %v486, %v485
    %v525 = vpack.c.b16 %v488, %v487
    %v526 = vpack.c.b16 %v490, %v489
    %v527 = vpack.c.b16 %v492, %v491
    %v528 = vpack.c.b16 %v494, %v493
    %v529 = vpack.c.b16 %v496, %v495
    %v530 = vpack.c.b16 %v498, %v497
    %v531 = vpack.c.b16 %v500, %v499
    %v532 = vpack.c.b16 %v502, %v501
    %v533 = vpack.c.b16 %v504, %v503
    %v534 = vpack.c.b16 %v506, %v505
    %v535 = vpack.c.b16 %v508, %v507
    %v536 = vpack.c.b16 %v510, %v509
    %v537 = vpack.c.b16 %v512, %v511
    %v538 = vpack.c.b16 %v514, %v513
    %563 = vmatprep.subr.bf16.mxu0 0
    %564 = vmatpush1.bf16.msra.mxu0 %v515
    %565 = vmatprep.subr.bf16.mxu0 0
    %566 = vmatpush1.bf16.msra.mxu0 %v516
    %567 = vmatprep.subr.bf16.mxu0 0
    %568 = vmatpush1.bf16.msra.mxu0 %v517
    %569 = vmatprep.subr.bf16.mxu0 0
    %570 = vmatpush1.bf16.msra.mxu0 %v518
    %571 = vmatprep.subr.bf16.mxu0 0
    %572 = vmatpush1.bf16.msra.mxu0 %v519
    %573 = vmatprep.subr.bf16.mxu0 0
    %574 = vmatpush1.bf16.msra.mxu0 %v520
    %575 = vmatprep.subr.bf16.mxu0 0
    %576 = vmatpush1.bf16.msra.mxu0 %v521
    %577 = vmatprep.subr.bf16.mxu0 0
    %578 = vmatpush1.bf16.msra.mxu0 %v522
    %579 = vmatprep.subr.bf16.mxu0 0
    %580 = vmatpush1.bf16.msra.mxu0 %v523
    %581 = vmatprep.subr.bf16.mxu0 0
    %582 = vmatpush1.bf16.msra.mxu0 %v524
    %583 = vmatprep.subr.bf16.mxu0 0
    %584 = vmatpush1.bf16.msra.mxu0 %v525
    %585 = vmatprep.subr.bf16.mxu0 0
    %586 = vmatpush1.bf16.msra.mxu0 %v526
    %587 = vmatprep.subr.bf16.mxu0 0
    %588 = vmatpush1.bf16.msra.mxu0 %v527
    %589 = vmatprep.subr.bf16.mxu0 0
    %590 = vmatpush1.bf16.msra.mxu0 %v528
    %591 = vmatprep.subr.bf16.mxu0 0
    %592 = vmatpush1.bf16.msra.mxu0 %v529
    %593 = vmatprep.subr.bf16.mxu0 0
    %594 = vmatpush1.bf16.msra.mxu0 %v530
    %595 = vmatprep.mubr.bf16.mxu0 %v362
    %596 = vmatmul.mubr.bf16.gmra.mrb[0].mxu0 %v361
    %v597 = vpop.f32.mrb[0].mxu0
    %v598 = vadd.f32 %v417, %v597
    %v599 = vpop.f32.mrb[0].mxu0
    %v600 = vpop.f32.mrb[0].mxu0
    %v601 = vpop.f32.mrb[0].mxu0
    %602 = vdwg.mxu0
    %603 = vmatprep.subr.bf16.mxu0 0
    %604 = vmatpush1.bf16.msra.mxu0 %v531
    %605 = vmatprep.subr.bf16.mxu0 0
    %606 = vmatpush1.bf16.msra.mxu0 %v532
    %607 = vmatprep.subr.bf16.mxu0 0
    %608 = vmatpush1.bf16.msra.mxu0 %v533
    %609 = vmatprep.subr.bf16.mxu0 0
    %610 = vmatpush1.bf16.msra.mxu0 %v534
    %611 = vmatprep.subr.bf16.mxu0 0
    %612 = vmatpush1.bf16.msra.mxu0 %v535
    %613 = vmatprep.subr.bf16.mxu0 0
    %614 = vmatpush1.bf16.msra.mxu0 %v536
    %615 = vmatprep.subr.bf16.mxu0 0
    %616 = vmatpush1.bf16.msra.mxu0 %v537
    %617 = vmatprep.subr.bf16.mxu0 0
    %618 = vmatpush1.bf16.msra.mxu0 %v538
    %619 = vmatprep.subr.bf16.mxu0 0
    %620 = vmatpush1.bf16.msra.mxu0 0
    %621 = vmatprep.subr.bf16.mxu0 0
    %622 = vmatpush1.bf16.msra.mxu0 0
    %623 = vmatprep.subr.bf16.mxu0 0
    %624 = vmatpush1.bf16.msra.mxu0 0
    %625 = vmatprep.subr.bf16.mxu0 0
    %626 = vmatpush1.bf16.msra.mxu0 0
    %627 = vmatprep.subr.bf16.mxu0 0
    %628 = vmatpush1.bf16.msra.mxu0 0
    %629 = vmatprep.subr.bf16.mxu0 0
    %630 = vmatpush1.bf16.msra.mxu0 0
    %631 = vmatprep.subr.bf16.mxu0 0
    %632 = vmatpush1.bf16.msra.mxu0 0
    %633 = vmatprep.subr.bf16.mxu0 0
    %634 = vmatpush1.bf16.msra.mxu0 0
    %635 = vmatprep.mubr.bf16.mxu0 0
    %636 = vmatmul.mubr.bf16.gmra.mrb[0].mxu0 %v363
    %v637 = vpop.f32.mrb[0].mxu0
    %v638 = vadd.f32 %v598, %v637
    %v639 = vpop.f32.mrb[0].mxu0
    %v640 = vpop.f32.mrb[0].mxu0
    %v641 = vpop.f32.mrb[0].mxu0
    %642 = vdwg.mxu0
    %643 = vst [vmem:[#allocation13] sm:$0x3] %v638
    %644 = vst [vmem:[#allocation2] sm:$0x3] %v101
    %645 = vst [vmem:[#allocation2 + $0x2] sm:$0x3] %v638
    %v646 = vld [vmem:[#allocation2] sm:$0xf]
    %v647 = vpack.c.bf16 %v646, %v646
    %v648 = vld [vmem:[#allocation12] sm:$0xff]
    %v649 = vld [vmem:[#allocation12 + $0x8] sm:$0xff]
    %v650 = vld [vmem:[#allocation12 + $0x10] sm:$0xff]
    %v651 = vld [vmem:[#allocation12 + $0x18] sm:$0xff]
    %v652 = vld [vmem:[#allocation12 + $0x20] sm:$0xff]
    %v653 = vld [vmem:[#allocation12 + $0x28] sm:$0xff]
    %v654 = vld [vmem:[#allocation12 + $0x30] sm:$0xff]
    %v655 = vld [vmem:[#allocation12 + $0x38] sm:$0xff]
    %v656 = vld [vmem:[#allocation12 + $0x40] sm:$0xff]
    %v657 = vld [vmem:[#allocation12 + $0x48] sm:$0xff]
    %v658 = vld [vmem:[#allocation12 + $0x50] sm:$0xff]
    %v659 = vld [vmem:[#allocation12 + $0x58] sm:$0xff]
    %v660 = vld [vmem:[#allocation12 + $0x60] sm:$0xff]
    %v661 = vld [vmem:[#allocation12 + $0x68] sm:$0xff]
    %v662 = vld [vmem:[#allocation12 + $0x70] sm:$0xff]
    %v663 = vld [vmem:[#allocation12 + $0x78] sm:$0xff]
    %v680 = vunpack.c.l.b16 %v648
    %v681 = vunpack.c.h.b16 %v648
    %v682 = vunpack.c.l.b16 %v649
    %v683 = vunpack.c.h.b16 %v649
    %v684 = vunpack.c.l.b16 %v650
    %v685 = vunpack.c.h.b16 %v650
    %v686 = vunpack.c.l.b16 %v651
    %v687 = vunpack.c.h.b16 %v651
    %v688 = vunpack.c.l.b16 %v652
    %v689 = vunpack.c.h.b16 %v652
    %v690 = vunpack.c.l.b16 %v653
    %v691 = vunpack.c.h.b16 %v653
    %v692 = vunpack.c.l.b16 %v654
    %v693 = vunpack.c.h.b16 %v654
    %v694 = vunpack.c.l.b16 %v655
    %v695 = vunpack.c.h.b16 %v655
    %v696 = vunpack.c.l.b16 %v656
    %v697 = vunpack.c.h.b16 %v656
    %v698 = vunpack.c.l.b16 %v657
    %v699 = vunpack.c.h.b16 %v657
    %v700 = vunpack.c.l.b16 %v658
    %v701 = vunpack.c.h.b16 %v658
    %v702 = vunpack.c.l.b16 %v659
    %v703 = vunpack.c.h.b16 %v659
    %v704 = vunpack.c.l.b16 %v660
    %v705 = vunpack.c.h.b16 %v660
    %v706 = vunpack.c.l.b16 %v661
    %v707 = vunpack.c.h.b16 %v661
    %v708 = vunpack.c.l.b16 %v662
    %v709 = vunpack.c.h.b16 %v662
    %v710 = vunpack.c.l.b16 %v663
    %v711 = vunpack.c.h.b16 %v663
    %v712 = vpack.c.b16 %v682, %v680
    %v713 = vpack.c.b16 %v683, %v681
    %v714 = vpack.c.b16 %v686, %v684
    %v715 = vpack.c.b16 %v687, %v685
    %v716 = vpack.c.b16 %v690, %v688
    %v717 = vpack.c.b16 %v691, %v689
    %v718 = vpack.c.b16 %v694, %v692
    %v719 = vpack.c.b16 %v695, %v693
    %v720 = vpack.c.b16 %v698, %v696
    %v721 = vpack.c.b16 %v699, %v697
    %v722 = vpack.c.b16 %v702, %v700
    %v723 = vpack.c.b16 %v703, %v701
    %v724 = vpack.c.b16 %v706, %v704
    %v725 = vpack.c.b16 %v707, %v705
    %v726 = vpack.c.b16 %v710, %v708
    %v727 = vpack.c.b16 %v711, %v709
    %744 = vmatprep.subr.bf16.mxu0 %v713
    %745 = vmatpush1.bf16.msra.mxu0 %v712
    %746 = vmatprep.subr.bf16.mxu0 %v715
    %747 = vmatpush1.bf16.msra.mxu0 %v714
    %748 = vmatprep.subr.bf16.mxu0 %v717
    %749 = vmatpush1.bf16.msra.mxu0 %v716
    %750 = vmatprep.subr.bf16.mxu0 %v719
    %751 = vmatpush1.bf16.msra.mxu0 %v718
    %752 = vmatprep.subr.bf16.mxu0 %v721
    %753 = vmatpush1.bf16.msra.mxu0 %v720
    %754 = vmatprep.subr.bf16.mxu0 %v723
    %755 = vmatpush1.bf16.msra.mxu0 %v722
    %756 = vmatprep.subr.bf16.mxu0 %v725
    %757 = vmatpush1.bf16.msra.mxu0 %v724
    %758 = vmatprep.subr.bf16.mxu0 %v727
    %759 = vmatpush1.bf16.msra.mxu0 %v726
    %760 = vmatprep.subr.bf16.mxu0 0
    %761 = vmatpush1.bf16.msra.mxu0 0
    %762 = vmatprep.subr.bf16.mxu0 0
    %763 = vmatpush1.bf16.msra.mxu0 0
    %764 = vmatprep.subr.bf16.mxu0 0
    %765 = vmatpush1.bf16.msra.mxu0 0
    %766 = vmatprep.subr.bf16.mxu0 0
    %767 = vmatpush1.bf16.msra.mxu0 0
    %768 = vmatprep.subr.bf16.mxu0 0
    %769 = vmatpush1.bf16.msra.mxu0 0
    %770 = vmatprep.subr.bf16.mxu0 0
    %771 = vmatpush1.bf16.msra.mxu0 0
    %772 = vmatprep.subr.bf16.mxu0 0
    %773 = vmatpush1.bf16.msra.mxu0 0
    %774 = vmatprep.subr.bf16.mxu0 0
    %775 = vmatpush1.bf16.msra.mxu0 0
    %776 = vmatprep.mubr.bf16.mxu0 0
    %777 = vmatmul.mubr.bf16.gmra.mrb[0].mxu0 %v647
    %v778 = vpop.f32.mrb[0].mxu0
    %v779 = vadd.f32 0.0, %v778
    %v780 = vpop.f32.mrb[0].mxu0
    %v781 = vadd.f32 0.0, %v780
    %v782 = vpop.f32.mrb[0].mxu0
    %v783 = vpop.f32.mrb[0].mxu0
    %784 = vdwg.mxu0
    %v787 = vcombine.low %v779, %v781
    %v789 = vunpack.c.l.s4 1983009808
    %v790 = vunpack.c.0.s8 %v789
    %v791 = vlaneseq
    %v792 = vshrl.u32 %v791, 7
    %v793 = vsub.s32 %v790, %v792
    %v794 = vrot.slane %v787, %v793
    %v795 = vcombine.high %v794, %v794
    %797 = vst [vmem:[#allocation14] sm:$0xf] %v795
    %799 = vst [vmem:[#allocation3] sm:$0xf] %v794
    %800 = vst [vmem:[#allocation3 + $0x4] sm:$0xf] %v795
    %v801 = vld [vmem:[#allocation3] sm:$0xff]
    %v803 = vcombine.high %v801, %v801
    %v805 = vunpack.c.l.s4 1983009808
    %v806 = vunpack.c.0.s8 %v805
    %v807 = vlaneseq
    %v808 = vshrl.u32 %v807, 7
    %v809 = vsub.s32 %v806, %v808
    %v810 = vrot.slane %v801, %v809
    %v812 = vunpack.c.l.s4 1983009808
    %v813 = vunpack.c.0.s8 %v812
    %v814 = vlaneseq
    %v815 = vshrl.u32 %v814, 7
    %v816 = vsub.s32 %v813, %v815
    %v817 = vrot.slane %v803, %v816
    %v818 = vcombine.high %v810, %v810
    %v819 = vcombine.high %v817, %v817
    %v824 = vpack.c.bf16 %v810, %v810
    %v825 = vpack.c.bf16 %v818, %v818
    %v826 = vpack.c.bf16 %v817, %v817
    %v827 = vpack.c.bf16 %v819, %v819
    %v828 = vld [vmem:[#allocation10] sm:$0xff]
    %v829 = vld [vmem:[#allocation10 + $0x8] sm:$0xff]
    %v830 = vld [vmem:[#allocation10 + $0x10] sm:$0xff]
    %v831 = vld [vmem:[#allocation10 + $0x18] sm:$0xff]
    %v832 = vld [vmem:[#allocation10 + $0x20] sm:$0xff]
    %v833 = vld [vmem:[#allocation10 + $0x28] sm:$0xff]
    %v834 = vld [vmem:[#allocation10 + $0x30] sm:$0xff]
    %v835 = vld [vmem:[#allocation10 + $0x38] sm:$0xff]
    %v836 = vld [vmem:[#allocation10 + $0x40] sm:$0xff]
    %v837 = vld [vmem:[#allocation10 + $0x48] sm:$0xff]
    %v838 = vld [vmem:[#allocation10 + $0x50] sm:$0xff]
    %v839 = vld [vmem:[#allocation10 + $0x58] sm:$0xff]
    %v840 = vld [vmem:[#allocation10 + $0x60] sm:$0xff]
    %v841 = vld [vmem:[#allocation10 + $0x68] sm:$0xff]
    %v842 = vld [vmem:[#allocation10 + $0x70] sm:$0xff]
    %v843 = vld [vmem:[#allocation10 + $0x78] sm:$0xff]
    %v844 = vld [vmem:[#allocation10 + $0x80] sm:$0xff]
    %v845 = vld [vmem:[#allocation10 + $0x88] sm:$0xff]
    %v846 = vld [vmem:[#allocation10 + $0x90] sm:$0xff]
    %v847 = vld [vmem:[#allocation10 + $0x98] sm:$0xff]
    %v848 = vld [vmem:[#allocation10 + $0xa0] sm:$0xff]
    %v849 = vld [vmem:[#allocation10 + $0xa8] sm:$0xff]
    %v850 = vld [vmem:[#allocation10 + $0xb0] sm:$0xff]
    %v851 = vld [vmem:[#allocation10 + $0xb8] sm:$0xff]
    %v852 = vld [vmem:[#allocation10 + $0xc0] sm:$0xff]
    %v853 = vld [vmem:[#allocation10 + $0xc8] sm:$0xff]
    %v854 = vld [vmem:[#allocation10 + $0xd0] sm:$0xff]
    %v855 = vld [vmem:[#allocation10 + $0xd8] sm:$0xff]
    %v856 = vld [vmem:[#allocation10 + $0xe0] sm:$0xff]
    %v857 = vld [vmem:[#allocation10 + $0xe8] sm:$0xff]
    %v858 = vld [vmem:[#allocation10 + $0xf0] sm:$0xff]
    %v859 = vld [vmem:[#allocation10 + $0xf8] sm:$0xff]
    %v860 = vld [vmem:[#allocation10 + $0x100] sm:$0xff]
    %v861 = vld [vmem:[#allocation10 + $0x108] sm:$0xff]
    %v862 = vld [vmem:[#allocation10 + $0x110] sm:$0xff]
    %v863 = vld [vmem:[#allocation10 + $0x118] sm:$0xff]
    %v864 = vld [vmem:[#allocation10 + $0x120] sm:$0xff]
    %v865 = vld [vmem:[#allocation10 + $0x128] sm:$0xff]
    %v866 = vld [vmem:[#allocation10 + $0x130] sm:$0xff]
    %v867 = vld [vmem:[#allocation10 + $0x138] sm:$0xff]
    %v868 = vld [vmem:[#allocation10 + $0x140] sm:$0xff]
    %v869 = vld [vmem:[#allocation10 + $0x148] sm:$0xff]
    %v870 = vld [vmem:[#allocation10 + $0x150] sm:$0xff]
    %v871 = vld [vmem:[#allocation10 + $0x158] sm:$0xff]
    %v872 = vld [vmem:[#allocation10 + $0x160] sm:$0xff]
    %v873 = vld [vmem:[#allocation10 + $0x168] sm:$0xff]
    %v874 = vld [vmem:[#allocation10 + $0x170] sm:$0xff]
    %v875 = vld [vmem:[#allocation10 + $0x178] sm:$0xff]
    %v876 = vld [vmem:[#allocation10 + $0x180] sm:$0xff]
    %v877 = vld [vmem:[#allocation10 + $0x188] sm:$0xff]
    %v878 = vld [vmem:[#allocation10 + $0x190] sm:$0xff]
    %v879 = vld [vmem:[#allocation10 + $0x198] sm:$0xff]
    %v880 = vld [vmem:[#allocation10 + $0x1a0] sm:$0xff]
    %v881 = vld [vmem:[#allocation10 + $0x1a8] sm:$0xff]
    %v882 = vld [vmem:[#allocation10 + $0x1b0] sm:$0xff]
    %v883 = vld [vmem:[#allocation10 + $0x1b8] sm:$0xff]
    %v884 = vld [vmem:[#allocation10 + $0x1c0] sm:$0xff]
    %v885 = vld [vmem:[#allocation10 + $0x1c8] sm:$0xff]
    %v886 = vld [vmem:[#allocation10 + $0x1d0] sm:$0xff]
    %v887 = vld [vmem:[#allocation10 + $0x1d8] sm:$0xff]
    %v888 = vld [vmem:[#allocation10 + $0x1e0] sm:$0xff]
    %v889 = vld [vmem:[#allocation10 + $0x1e8] sm:$0xff]
    %v890 = vld [vmem:[#allocation10 + $0x1f0] sm:$0xff]
    %v891 = vld [vmem:[#allocation10 + $0x1f8] sm:$0xff]
    %v892 = vld [vmem:[%s6] sm:$0x3]
    %v894 = vlaneseq
    %v895 = vshrl.u32 %v894, 7
    %v896 = vsub.s32 0, %v895
    %v897 = vrot.slane %v892, %v896
    %v898 = vlaneseq
    %v899 = vshrl.u32 %v898, 7
    %v900 = vsub.s32 1, %v899
    %v901 = vrot.slane %v892, %v900
    %v968 = vunpack.c.l.b16 %v828
    %v969 = vunpack.c.h.b16 %v828
    %v970 = vunpack.c.l.b16 %v829
    %v971 = vunpack.c.h.b16 %v829
    %v972 = vunpack.c.l.b16 %v830
    %v973 = vunpack.c.h.b16 %v830
    %v974 = vunpack.c.l.b16 %v831
    %v975 = vunpack.c.h.b16 %v831
    %v976 = vunpack.c.l.b16 %v832
    %v977 = vunpack.c.h.b16 %v832
    %v978 = vunpack.c.l.b16 %v833
    %v979 = vunpack.c.h.b16 %v833
    %v980 = vunpack.c.l.b16 %v834
    %v981 = vunpack.c.h.b16 %v834
    %v982 = vunpack.c.l.b16 %v835
    %v983 = vunpack.c.h.b16 %v835
    %v984 = vunpack.c.l.b16 %v836
    %v985 = vunpack.c.h.b16 %v836
    %v986 = vunpack.c.l.b16 %v837
    %v987 = vunpack.c.h.b16 %v837
    %v988 = vunpack.c.l.b16 %v838
    %v989 = vunpack.c.h.b16 %v838
    %v990 = vunpack.c.l.b16 %v839
    %v991 = vunpack.c.h.b16 %v839
    %v992 = vunpack.c.l.b16 %v840
    %v993 = vunpack.c.h.b16 %v840
    %v994 = vunpack.c.l.b16 %v841
    %v995 = vunpack.c.h.b16 %v841
    %v996 = vunpack.c.l.b16 %v842
    %v997 = vunpack.c.h.b16 %v842
    %v998 = vunpack.c.l.b16 %v843
    %v999 = vunpack.c.h.b16 %v843
    %v1000 = vunpack.c.l.b16 %v844
    %v1001 = vunpack.c.h.b16 %v844
    %v1002 = vunpack.c.l.b16 %v845
    %v1003 = vunpack.c.h.b16 %v845
    %v1004 = vunpack.c.l.b16 %v846
    %v1005 = vunpack.c.h.b16 %v846
    %v1006 = vunpack.c.l.b16 %v847
    %v1007 = vunpack.c.h.b16 %v847
    %v1008 = vunpack.c.l.b16 %v848
    %v1009 = vunpack.c.h.b16 %v848
    %v1010 = vunpack.c.l.b16 %v849
    %v1011 = vunpack.c.h.b16 %v849
    %v1012 = vunpack.c.l.b16 %v850
    %v1013 = vunpack.c.h.b16 %v850
    %v1014 = vunpack.c.l.b16 %v851
    %v1015 = vunpack.c.h.b16 %v851
    %v1016 = vunpack.c.l.b16 %v852
    %v1017 = vunpack.c.h.b16 %v852
    %v1018 = vunpack.c.l.b16 %v853
    %v1019 = vunpack.c.h.b16 %v853
    %v1020 = vunpack.c.l.b16 %v854
    %v1021 = vunpack.c.h.b16 %v854
    %v1022 = vunpack.c.l.b16 %v855
    %v1023 = vunpack.c.h.b16 %v855
    %v1024 = vunpack.c.l.b16 %v856
    %v1025 = vunpack.c.h.b16 %v856
    %v1026 = vunpack.c.l.b16 %v857
    %v1027 = vunpack.c.h.b16 %v857
    %v1028 = vunpack.c.l.b16 %v858
    %v1029 = vunpack.c.h.b16 %v858
    %v1030 = vunpack.c.l.b16 %v859
    %v1031 = vunpack.c.h.b16 %v859
    %v1032 = vunpack.c.l.b16 %v860
    %v1033 = vunpack.c.h.b16 %v860
    %v1034 = vunpack.c.l.b16 %v861
    %v1035 = vunpack.c.h.b16 %v861
    %v1036 = vunpack.c.l.b16 %v862
    %v1037 = vunpack.c.h.b16 %v862
    %v1038 = vunpack.c.l.b16 %v863
    %v1039 = vunpack.c.h.b16 %v863
    %v1040 = vunpack.c.l.b16 %v864
    %v1041 = vunpack.c.h.b16 %v864
    %v1042 = vunpack.c.l.b16 %v865
    %v1043 = vunpack.c.h.b16 %v865
    %v1044 = vunpack.c.l.b16 %v866
    %v1045 = vunpack.c.h.b16 %v866
    %v1046 = vunpack.c.l.b16 %v867
    %v1047 = vunpack.c.h.b16 %v867
    %v1048 = vunpack.c.l.b16 %v868
    %v1049 = vunpack.c.h.b16 %v868
    %v1050 = vunpack.c.l.b16 %v869
    %v1051 = vunpack.c.h.b16 %v869
    %v1052 = vunpack.c.l.b16 %v870
    %v1053 = vunpack.c.h.b16 %v870
    %v1054 = vunpack.c.l.b16 %v871
    %v1055 = vunpack.c.h.b16 %v871
    %v1056 = vunpack.c.l.b16 %v872
    %v1057 = vunpack.c.h.b16 %v872
    %v1058 = vunpack.c.l.b16 %v873
    %v1059 = vunpack.c.h.b16 %v873
    %v1060 = vunpack.c.l.b16 %v874
    %v1061 = vunpack.c.h.b16 %v874
    %v1062 = vunpack.c.l.b16 %v875
    %v1063 = vunpack.c.h.b16 %v875
    %v1064 = vunpack.c.l.b16 %v876
    %v1065 = vunpack.c.h.b16 %v876
    %v1066 = vunpack.c.l.b16 %v877
    %v1067 = vunpack.c.h.b16 %v877
    %v1068 = vunpack.c.l.b16 %v878
    %v1069 = vunpack.c.h.b16 %v878
    %v1070 = vunpack.c.l.b16 %v879
    %v1071 = vunpack.c.h.b16 %v879
    %v1072 = vunpack.c.l.b16 %v880
    %v1073 = vunpack.c.h.b16 %v880
    %v1074 = vunpack.c.l.b16 %v881
    %v1075 = vunpack.c.h.b16 %v881
    %v1076 = vunpack.c.l.b16 %v882
    %v1077 = vunpack.c.h.b16 %v882
    %v1078 = vunpack.c.l.b16 %v883
    %v1079 = vunpack.c.h.b16 %v883
    %v1080 = vunpack.c.l.b16 %v884
    %v1081 = vunpack.c.h.b16 %v884
    %v1082 = vunpack.c.l.b16 %v885
    %v1083 = vunpack.c.h.b16 %v885
    %v1084 = vunpack.c.l.b16 %v886
    %v1085 = vunpack.c.h.b16 %v886
    %v1086 = vunpack.c.l.b16 %v887
    %v1087 = vunpack.c.h.b16 %v887
    %v1088 = vunpack.c.l.b16 %v888
    %v1089 = vunpack.c.h.b16 %v888
    %v1090 = vunpack.c.l.b16 %v889
    %v1091 = vunpack.c.h.b16 %v889
    %v1092 = vunpack.c.l.b16 %v890
    %v1093 = vunpack.c.h.b16 %v890
    %v1094 = vunpack.c.l.b16 %v891
    %v1095 = vunpack.c.h.b16 %v891
    %v1096 = vpack.c.b16 %v970, %v968
    %v1097 = vpack.c.b16 %v971, %v969
    %v1098 = vpack.c.b16 %v974, %v972
    %v1099 = vpack.c.b16 %v975, %v973
    %v1100 = vpack.c.b16 %v978, %v976
    %v1101 = vpack.c.b16 %v979, %v977
    %v1102 = vpack.c.b16 %v982, %v980
    %v1103 = vpack.c.b16 %v983, %v981
    %v1104 = vpack.c.b16 %v986, %v984
    %v1105 = vpack.c.b16 %v987, %v985
    %v1106 = vpack.c.b16 %v990, %v988
    %v1107 = vpack.c.b16 %v991, %v989
    %v1108 = vpack.c.b16 %v994, %v992
    %v1109 = vpack.c.b16 %v995, %v993
    %v1110 = vpack.c.b16 %v998, %v996
    %v1111 = vpack.c.b16 %v999, %v997
    %v1112 = vpack.c.b16 %v1002, %v1000
    %v1113 = vpack.c.b16 %v1003, %v1001
    %v1114 = vpack.c.b16 %v1006, %v1004
    %v1115 = vpack.c.b16 %v1007, %v1005
    %v1116 = vpack.c.b16 %v1010, %v1008
    %v1117 = vpack.c.b16 %v1011, %v1009
    %v1118 = vpack.c.b16 %v1014, %v1012
    %v1119 = vpack.c.b16 %v1015, %v1013
    %v1120 = vpack.c.b16 %v1018, %v1016
    %v1121 = vpack.c.b16 %v1019, %v1017
    %v1122 = vpack.c.b16 %v1022, %v1020
    %v1123 = vpack.c.b16 %v1023, %v1021
    %v1124 = vpack.c.b16 %v1026, %v1024
    %v1125 = vpack.c.b16 %v1027, %v1025
    %v1126 = vpack.c.b16 %v1030, %v1028
    %v1127 = vpack.c.b16 %v1031, %v1029
    %v1128 = vpack.c.b16 %v1034, %v1032
    %v1129 = vpack.c.b16 %v1035, %v1033
    %v1130 = vpack.c.b16 %v1038, %v1036
    %v1131 = vpack.c.b16 %v1039, %v1037
    %v1132 = vpack.c.b16 %v1042, %v1040
    %v1133 = vpack.c.b16 %v1043, %v1041
    %v1134 = vpack.c.b16 %v1046, %v1044
    %v1135 = vpack.c.b16 %v1047, %v1045
    %v1136 = vpack.c.b16 %v1050, %v1048
    %v1137 = vpack.c.b16 %v1051, %v1049
    %v1138 = vpack.c.b16 %v1054, %v1052
    %v1139 = vpack.c.b16 %v1055, %v1053
    %v1140 = vpack.c.b16 %v1058, %v1056
    %v1141 = vpack.c.b16 %v1059, %v1057
    %v1142 = vpack.c.b16 %v1062, %v1060
    %v1143 = vpack.c.b16 %v1063, %v1061
    %v1144 = vpack.c.b16 %v1066, %v1064
    %v1145 = vpack.c.b16 %v1067, %v1065
    %v1146 = vpack.c.b16 %v1070, %v1068
    %v1147 = vpack.c.b16 %v1071, %v1069
    %v1148 = vpack.c.b16 %v1074, %v1072
    %v1149 = vpack.c.b16 %v1075, %v1073
    %v1150 = vpack.c.b16 %v1078, %v1076
    %v1151 = vpack.c.b16 %v1079, %v1077
    %v1152 = vpack.c.b16 %v1082, %v1080
    %v1153 = vpack.c.b16 %v1083, %v1081
    %v1154 = vpack.c.b16 %v1086, %v1084
    %v1155 = vpack.c.b16 %v1087, %v1085
    %v1156 = vpack.c.b16 %v1090, %v1088
    %v1157 = vpack.c.b16 %v1091, %v1089
    %v1158 = vpack.c.b16 %v1094, %v1092
    %v1159 = vpack.c.b16 %v1095, %v1093
    %1224 = vmatprep.subr.bf16.mxu0 %v1097
    %1225 = vmatpush1.bf16.msra.mxu0 %v1096
    %1226 = vmatprep.subr.bf16.mxu0 %v1099
    %1227 = vmatpush1.bf16.msra.mxu0 %v1098
    %1228 = vmatprep.subr.bf16.mxu0 %v1101
    %1229 = vmatpush1.bf16.msra.mxu0 %v1100
    %1230 = vmatprep.subr.bf16.mxu0 %v1103
    %1231 = vmatpush1.bf16.msra.mxu0 %v1102
    %1232 = vmatprep.subr.bf16.mxu0 %v1105
    %1233 = vmatpush1.bf16.msra.mxu0 %v1104
    %1234 = vmatprep.subr.bf16.mxu0 %v1107
    %1235 = vmatpush1.bf16.msra.mxu0 %v1106
    %1236 = vmatprep.subr.bf16.mxu0 %v1109
    %1237 = vmatpush1.bf16.msra.mxu0 %v1108
    %1238 = vmatprep.subr.bf16.mxu0 %v1111
    %1239 = vmatpush1.bf16.msra.mxu0 %v1110
    %1240 = vmatprep.subr.bf16.mxu0 %v1113
    %1241 = vmatpush1.bf16.msra.mxu0 %v1112
    %1242 = vmatprep.subr.bf16.mxu0 %v1115
    %1243 = vmatpush1.bf16.msra.mxu0 %v1114
    %1244 = vmatprep.subr.bf16.mxu0 %v1117
    %1245 = vmatpush1.bf16.msra.mxu0 %v1116
    %1246 = vmatprep.subr.bf16.mxu0 %v1119
    %1247 = vmatpush1.bf16.msra.mxu0 %v1118
    %1248 = vmatprep.subr.bf16.mxu0 %v1121
    %1249 = vmatpush1.bf16.msra.mxu0 %v1120
    %1250 = vmatprep.subr.bf16.mxu0 %v1123
    %1251 = vmatpush1.bf16.msra.mxu0 %v1122
    %1252 = vmatprep.subr.bf16.mxu0 %v1125
    %1253 = vmatpush1.bf16.msra.mxu0 %v1124
    %1254 = vmatprep.subr.bf16.mxu0 %v1127
    %1255 = vmatpush1.bf16.msra.mxu0 %v1126
    %1256 = vmatprep.mubr.bf16.mxu0 %v825
    %1257 = vmatmul.mubr.bf16.gmra.mrb[0].mxu0 %v824
    %v1258 = vpop.f32.mrb[0].mxu0
    %v1259 = vadd.f32 %v897, %v1258
    %v1260 = vpop.f32.mrb[0].mxu0
    %v1261 = vadd.f32 %v901, %v1260
    %v1262 = vpop.f32.mrb[0].mxu0
    %v1263 = vpop.f32.mrb[0].mxu0
    %1264 = vdwg.mxu0
    %1265 = vmatprep.subr.bf16.mxu0 %v1129
    %1266 = vmatpush1.bf16.msra.mxu0 %v1128
    %1267 = vmatprep.subr.bf16.mxu0 %v1131
    %1268 = vmatpush1.bf16.msra.mxu0 %v1130
    %1269 = vmatprep.subr.bf16.mxu0 %v1133
    %1270 = vmatpush1.bf16.msra.mxu0 %v1132
    %1271 = vmatprep.subr.bf16.mxu0 %v1135
    %1272 = vmatpush1.bf16.msra.mxu0 %v1134
    %1273 = vmatprep.subr.bf16.mxu0 %v1137
    %1274 = vmatpush1.bf16.msra.mxu0 %v1136
    %1275 = vmatprep.subr.bf16.mxu0 %v1139
    %1276 = vmatpush1.bf16.msra.mxu0 %v1138
    %1277 = vmatprep.subr.bf16.mxu0 %v1141
    %1278 = vmatpush1.bf16.msra.mxu0 %v1140
    %1279 = vmatprep.subr.bf16.mxu0 %v1143
    %1280 = vmatpush1.bf16.msra.mxu0 %v1142
    %1281 = vmatprep.subr.bf16.mxu0 %v1145
    %1282 = vmatpush1.bf16.msra.mxu0 %v1144
    %1283 = vmatprep.subr.bf16.mxu0 %v1147
    %1284 = vmatpush1.bf16.msra.mxu0 %v1146
    %1285 = vmatprep.subr.bf16.mxu0 %v1149
    %1286 = vmatpush1.bf16.msra.mxu0 %v1148
    %1287 = vmatprep.subr.bf16.mxu0 %v1151
    %1288 = vmatpush1.bf16.msra.mxu0 %v1150
    %1289 = vmatprep.subr.bf16.mxu0 %v1153
    %1290 = vmatpush1.bf16.msra.mxu0 %v1152
    %1291 = vmatprep.subr.bf16.mxu0 %v1155
    %1292 = vmatpush1.bf16.msra.mxu0 %v1154
    %1293 = vmatprep.subr.bf16.mxu0 %v1157
    %1294 = vmatpush1.bf16.msra.mxu0 %v1156
    %1295 = vmatprep.subr.bf16.mxu0 %v1159
    %1296 = vmatpush1.bf16.msra.mxu0 %v1158
    %1297 = vmatprep.mubr.bf16.mxu0 %v827
    %1298 = vmatmul.mubr.bf16.gmra.mrb[0].mxu0 %v826
    %v1299 = vpop.f32.mrb[0].mxu0
    %v1300 = vadd.f32 %v1259, %v1299
    %v1301 = vpop.f32.mrb[0].mxu0
    %v1302 = vadd.f32 %v1261, %v1301
    %v1303 = vpop.f32.mrb[0].mxu0
    %v1304 = vpop.f32.mrb[0].mxu0
    %1305 = vdwg.mxu0
    %v1308 = vcombine.low %v1300, %v1302
    %v1310 = vunpack.c.l.s4 1983009808
    %v1311 = vunpack.c.0.s8 %v1310
    %v1312 = vlaneseq
    %v1313 = vshrl.u32 %v1312, 7
    %v1314 = vsub.s32 %v1311, %v1313
    %v1315 = vrot.slane %v1308, %v1314
    %1317 = vst [vmem:[#allocation16] sm:$0xf] %v1315
    // Predicated region
    $region54: #{tpu_custom_call.1} parent=1 // pred_check
      _
    $region55: #{tpu_custom_call.1} parent=1 // pred_check_branch
      %1319 = sbr.rel (0) target = $region57
    $region56: #{tpu_custom_call.1} parent=1 // pred_region
      %s1321 = ssub.s32 32, 32
      %1322 = vsyncadd [#allocation6], %s1321
      %s1324 = sshll.u32 [#allocation13], 4
      %s1325 = int_to_ptr.vmem [resolvable:$true] %s1324
      %1327 = dma.vmem_to_hbm [thread:$0]  %s1325, 32, %s8, [#allocation6]
    $region57: #{tpu_custom_call.1} parent=1 // pred_fallthru
      _
    // Predicated region
    $region58: #{tpu_custom_call.1} parent=1 // pred_check
      _
    $region59: #{tpu_custom_call.1} parent=1 // pred_check_branch
      %1329 = sbr.rel (0) target = $region61
    $region60: #{tpu_custom_call.1} parent=1 // pred_region
      %s1331 = ssub.s32 64, 64
      %1332 = vsyncadd [#allocation15], %s1331
      %s1334 = sshll.u32 [#allocation14], 4
      %s1335 = int_to_ptr.vmem [resolvable:$true] %s1334
      %1337 = dma.vmem_to_hbm [thread:$0]  %s1335, 64, %s9, [#allocation15]
    $region61: #{tpu_custom_call.1} parent=1 // pred_fallthru
      _
    // Predicated region
    $region62: #{tpu_custom_call.1} parent=1 // pred_check
      _
    $region63: #{tpu_custom_call.1} parent=1 // pred_check_branch
      %1339 = sbr.rel (0) target = $region65
    $region64: #{tpu_custom_call.1} parent=1 // pred_region
      %s1341 = ssub.s32 64, 64
      %1342 = vsyncadd [#allocation15], %s1341
      %s1344 = sshll.u32 [#allocation16], 4
      %s1345 = int_to_ptr.vmem [resolvable:$true] %s1344
      %1347 = dma.vmem_to_hbm [thread:$0]  %s1345, 64, %s10, [#allocation15]
    $region65: #{tpu_custom_call.1} parent=1 // pred_fallthru
      _
    // Predicated region
    $region66: #{tpu_custom_call.1} parent=1 // pred_check
      _
    $region67: #{tpu_custom_call.1} parent=1 // pred_check_branch
      %1349 = sbr.rel (0) target = $region69
    $region68: #{tpu_custom_call.1} parent=1 // pred_region
      %1350 = dma.done [#allocation6], 32
    $region69: #{tpu_custom_call.1} parent=1 // pred_fallthru
      _
    // Predicated region
    $region70: #{tpu_custom_call.1} parent=1 // pred_check
      _
    $region71: #{tpu_custom_call.1} parent=1 // pred_check_branch
      %1352 = sbr.rel (0) target = $region73
    $region72: #{tpu_custom_call.1} parent=1 // pred_region
      %1353 = dma.done [#allocation15], 64
    $region73: #{tpu_custom_call.1} parent=1 // pred_fallthru
      _
    // Predicated region
    $region74: #{tpu_custom_call.1} parent=1 // pred_check
      _
    $region75: #{tpu_custom_call.1} parent=1 // pred_check_branch
      %1355 = sbr.rel (0) target = $region77
    $region76: #{tpu_custom_call.1} parent=1 // pred_region
      %1356 = dma.done [#allocation15], 64
    $region77: #{tpu_custom_call.1} parent=1 // pred_fallthru
      _
    %1357 = vsyncpa [#allocation5], 1
    %1358 = vsyncpa [#allocation8], 1
    %1359 = vsyncpa [#allocation11], 1
    %1360 = vsyncpa [#allocation6], 1
    %1361 = vsyncpa [#allocation15], 1

</llo_original>
